<compile_context>
chip_gen: v6e
topology: v6e:2x2x1
jax: 0.10.0
libtpu: 0.0.40
codegen_flags: <defaults>
</compile_context>

<pallas_src>
from dataclasses import dataclass

import jax
import jax.numpy as jnp
from jax.experimental import pallas as pl
from jax.experimental.pallas import tpu as pltpu

_NEG_INF = -1e30  # finite "-inf" so max / exp-sum never see NaNs


def _round_up(x, m):
    return ((x + m - 1) // m) * m


# ---------------------------------------------------------------------------
# Hardware queries (best effort; conservative fallbacks keep it safe anywhere).
# ---------------------------------------------------------------------------

def _tpu_info():
    try:
        return pltpu.get_tpu_info()
    except Exception:
        return None


def _vmem_capacity_bytes():
    info = _tpu_info()
    cap = getattr(info, "vmem_capacity_bytes", None) if info is not None else None
    if not cap:
        cap = 64 * 1024 * 1024      # conservative: v7x per-TensorCore VMEM
    return int(cap)


def _num_tensorcores():
    info = _tpu_info()
    if info is not None:
        for name in ("num_cores", "tensor_cores_per_chip", "cores_per_chip"):
            v = getattr(info, name, None)
            if isinstance(v, int) and v > 0:
                return v
    return 1


def _default_vmem_budget():
    # ~5/8 of physical VMEM: ~80 MiB on v5e/v6e (128 MiB), ~40 MiB on v7x (64 MiB).
    return (_vmem_capacity_bytes() * 5) // 8


def _vmem_limit_bytes(estimate):
    # Cap at 3/4 of physical (~96 MiB v5e/v6e, ~48 MiB v7x) to leave headroom
    # for compiler-internal scratch; never below 32 MiB.
    cap = (_vmem_capacity_bytes() * 3) // 4
    return max(32 * 1024 * 1024, min(cap, int(estimate) + (16 << 20)))


# ---------------------------------------------------------------------------
# Tile selection.
# ---------------------------------------------------------------------------

def _vmem_estimate(tm, tn, d, x_bytes, w_bytes, w_bufs=2):
    """Per-step VMEM footprint of the pass-1 kernel (buffered blocks + temps)."""
    return (2 * tm * d * x_bytes          # x row tile (double buffered, resident over j)
            + w_bufs * d * tn * w_bytes   # weight column tile
            + 2 * tn * 4                  # bias tile
            + 2 * tm * tn * 4             # logits output block (double buffered)
            + 4 * tm * 4                  # m/l scratch + lse output block
            + 3 * tm * tn * 4)            # in-kernel f32 temporaries (z, exp(z-m), ...)


def _choose_tn(d, n, op_bytes, tm_ref, tn_max, vmem_budget, w_bufs):
    """Class-tile width: lane aligned, >=256 preferred (fills the 256-wide MXU
    on v6e/v7x).  When over budget shrink tn BEFORE tm -- weight HBM traffic
    scales with 1/tm, not 1/tn."""
    n128 = _round_up(n, 128)
    tn = max(128, min((tn_max // 128) * 128, n128))
    while tn > 256 and _vmem_estimate(tm_ref, tn, d, op_bytes, op_bytes,
                                      w_bufs) > vmem_budget:
        tn = max(256, (tn // 2 // 128) * 128)
    return tn


# ---------------------------------------------------------------------------
# Parameter preparation (done ONCE; not per forward call).
# ---------------------------------------------------------------------------

@dataclass
class GeneratorParams:
    w_t: jax.Array            # (D, Np) in the MXU operand dtype, class-padded
    b: jax.Array              # (1, Np) f32; padded classes get -1e30
    n_classes: int            # real (unpadded) number of classes
    tn: int                   # class tile width (Np % tn == 0)
    vmem_budget_bytes: int
    weight_buffers: int = 2   # pl.Buffered depth for the weight stream


def prepare_generator_params(w_t, b, *, operand_dtype=jnp.bfloat16,
                             tm_max=512, tn_max=1024,
                             vmem_budget_bytes=None, weight_buffers=2):
    """Pad + cast the Linear(dim_model, n_classes) weights once.

    w_t: (D, N) = transposed nn.Linear weight; b: (N,) bias.
    operand_dtype: MXU operand dtype (bf16 default; accumulation stays f32).
    """
    d, n = w_t.shape
    if vmem_budget_bytes is None:
        vmem_budget_bytes = _default_vmem_budget()
    ob = jnp.dtype(operand_dtype).itemsize
    tn = _choose_tn(d, n, ob, tm_max, tn_max, vmem_budget_bytes, weight_buffers)
    np_ = _round_up(n, tn)

    w_pad = w_t.astype(operand_dtype)
    b_pad = b.astype(jnp.float32)
    if np_ != n:
        # Padded classes: zero weight columns + -1e30 bias -> behave as -inf.
        w_pad = jnp.pad(w_pad, ((0, 0), (0, np_ - n)))
        b_pad = jnp.pad(b_pad, ((0, np_ - n),), constant_values=_NEG_INF)
    b_pad = b_pad.reshape(1, np_)
    return GeneratorParams(w_t=w_pad, b=b_pad, n_classes=n, tn=tn,
                           vmem_budget_bytes=int(vmem_budget_bytes),
                           weight_buffers=int(weight_buffers))


# ---------------------------------------------------------------------------
# Kernels.
# ---------------------------------------------------------------------------

def _logits_lse_kernel(x_ref, w_ref, b_ref, logits_ref, lse_ref, m_sc, l_sc):
    """Pass 1: raw logits blocks + online (stable) log-sum-exp per row."""
    j = pl.program_id(1)

    @pl.when(j == 0)
    def _init():
        m_sc[...] = jnp.full_like(m_sc, _NEG_INF)
        l_sc[...] = jnp.zeros_like(l_sc)

    z = jnp.dot(x_ref[...], w_ref[...],
                preferred_element_type=jnp.float32) + b_ref[...]
    logits_ref[...] = z                                    # raw logits out

    m_prev = m_sc[...]
    m_new = jnp.maximum(m_prev, jnp.max(z, axis=-1, keepdims=True))
    l_sc[...] = (l_sc[...] * jnp.exp(m_prev - m_new)
                 + jnp.sum(jnp.exp(z - m_new), axis=-1, keepdims=True))
    m_sc[...] = m_new

    @pl.when(j == pl.num_programs(1) - 1)
    def _finalize():
        lse_ref[...] = m_sc[...] + jnp.log(l_sc[...])


def _normalize_kernel(logits_ref, lse_ref, o_ref):
    """Pass 2: log_probs = logits - lse (in place via input/output aliasing)."""
    o_ref[...] = logits_ref[...] - lse_ref[...]


# ---------------------------------------------------------------------------
# Forward.
# ---------------------------------------------------------------------------

def generator_forward(x, params: GeneratorParams, *, tm_max=512):
    """x: (..., D) -> (..., n_classes) f32 log-probabilities."""
    orig_shape = x.shape
    d = orig_shape[-1]
    assert params.w_t.shape[0] == d, "dim_model mismatch"
    np_ = params.w_t.shape[1]
    n = params.n_classes
    tn = params.tn
    wbufs = params.weight_buffers
    budget = params.vmem_budget_bytes

    x2 = x.reshape(-1, d).astype(params.w_t.dtype)
    m = x2.shape[0]
    ob = params.w_t.dtype.itemsize

    # Row tile: as large as the budget allows (weight HBM traffic ~ 1/tm).
    tm = min(tm_max, _round_up(m, 8))
    tm = max(8, (tm // 8) * 8)
    while tm > 8 and _vmem_estimate(tm, tn, d, ob, ob, wbufs) > budget:
        tm = max(8, (tm // 2 // 8) * 8)

    # Megacore: keep every TensorCore busy on the "parallel" row axis.
    cores = _num_tensorcores()
    mp0 = _round_up(m, 8)
    if cores > 1 and pl.cdiv(mp0, tm) < cores and mp0 >= 8 * cores:
        tm = max(8, ((mp0 // cores) // 8) * 8)

    mp = _round_up(m, tm)
    if mp != m:
        x2 = jnp.pad(x2, ((0, mp - m), (0, 0)))

    grid = (mp // tm, np_ // tn)
    n_row_tiles = mp // tm
    vmem_limit = _vmem_limit_bytes(_vmem_estimate(tm, tn, d, ob, ob, wbufs))

    if wbufs != 2:
        w_spec = pl.BlockSpec((d, tn), lambda i, j: (0, j),
                              pipeline_mode=pl.Buffered(wbufs))
    else:
        w_spec = pl.BlockSpec((d, tn), lambda i, j: (0, j))

    cost1 = pl.CostEstimate(
        flops=2 * mp * d * np_,
        transcendentals=mp * np_ + mp,
        bytes_accessed=(mp * d * ob                   # x rows (resident over j)
                        + n_row_tiles * d * np_ * ob  # weights, once per row tile
                        + n_row_tiles * np_ * 4       # bias, once per row tile
                        + mp * np_ * 4                # logits write
                        + mp * 4),                    # lse write
    )

    logits, lse = pl.pallas_call(
        _logits_lse_kernel,
        out_shape=(jax.ShapeDtypeStruct((mp, np_), jnp.float32),
                   jax.ShapeDtypeStruct((mp, 1), jnp.float32)),
        grid_spec=pltpu.PrefetchScalarGridSpec(
            num_scalar_prefetch=0,
            grid=grid,
            in_specs=[
                pl.BlockSpec((tm, d), lambda i, j: (i, 0)),   # x rows (resident over j)
                w_spec,                                       # weight column tile
                pl.BlockSpec((1, tn), lambda i, j: (0, j)),   # bias tile
            ],
            out_specs=(
                pl.BlockSpec((tm, tn), lambda i, j: (i, j)),  # raw logits block
                pl.BlockSpec((tm, 1), lambda i, j: (i, 0)),   # lse (resident over j)
            ),
            scratch_shapes=[pltpu.VMEM((tm, 1), jnp.float32),  # running max
                            pltpu.VMEM((tm, 1), jnp.float32)], # running sum-exp
        ),
        compiler_params=pltpu.CompilerParams(
            dimension_semantics=("parallel", "arbitrary"),
            vmem_limit_bytes=vmem_limit,
        ),
        cost_estimate=cost1,
    )(x2, params.w_t, params.b)

    cost2 = pl.CostEstimate(
        flops=mp * np_,
        transcendentals=0,
        bytes_accessed=2 * mp * np_ * 4 + mp * 4,
    )

    out = pl.pallas_call(
        _normalize_kernel,
        out_shape=jax.ShapeDtypeStruct((mp, np_), jnp.float32),
        grid_spec=pltpu.PrefetchScalarGridSpec(
            num_scalar_prefetch=0,
            grid=grid,
            in_specs=[pl.BlockSpec((tm, tn), lambda i, j: (i, j)),
                      pl.BlockSpec((tm, 1), lambda i, j: (i, 0))],
            out_specs=pl.BlockSpec((tm, tn), lambda i, j: (i, j)),
        ),
        compiler_params=pltpu.CompilerParams(
            dimension_semantics=("parallel", "parallel"),
            vmem_limit_bytes=vmem_limit,
        ),
        input_output_aliases={0: 0},   # normalize the logits buffer in place
        cost_estimate=cost2,
    )(logits, lse)

    out = out[:m, :n]
    return out.reshape(*orig_shape[:-1], n)


def generator_apply(x, w_t, b, *, operand_dtype=jnp.bfloat16, **kwargs):
    """Convenience one-shot API (prep + forward)."""
    params = prepare_generator_params(w_t, b, operand_dtype=operand_dtype)
    return generator_forward(x, params, **kwargs)


def init_generator_params(key, dim_model, n_classes):
    """Deterministic synthetic init matching nn.Linear(dim_model, n_classes)."""
    k_w, k_b = jax.random.split(key)
    bound = 1.0 / jnp.sqrt(jnp.float32(dim_model))
    # PyTorch stores weight as (n_classes, dim_model); we keep it transposed.
    w_t = jax.random.uniform(
        k_w, (dim_model, n_classes), jnp.float32, minval=-bound, maxval=bound)
    b = jax.random.uniform(
        k_b, (n_classes,), jnp.float32, minval=-bound, maxval=bound)
    return w_t, b


if __name__ == "__main__":
    key = jax.random.PRNGKey(0)
    k_x, k_p, k_x2, k_p2 = jax.random.split(key, 4)

    # Case 1: toy shape, f32 MXU operands (tight tolerance).
    batch, seq, dim_model, n_classes = 2, 8, 32, 16
    x = jax.random.normal(k_x, (batch, seq, dim_model), jnp.float32)
    w_t, b = init_generator_params(k_p, dim_model, n_classes)
    ref = jax.nn.log_softmax(x @ w_t + b, axis=-1)

    params_f32 = prepare_generator_params(w_t, b, operand_dtype=jnp.float32)
    out = jax.block_until_ready(generator_forward(x, params_f32))
    assert out.shape == (batch, seq, n_classes)
    assert out.dtype == jnp.float32
    assert jnp.allclose(out, ref, atol=1e-5, rtol=1e-5)

    # Case 1b: default bf16 MXU operand path (v5e/v6e/v7x fast path).
    params_bf16 = prepare_generator_params(w_t, b)     # bf16 by default
    out_bf = jax.block_until_ready(generator_forward(x, params_bf16))
    assert out_bf.shape == (batch, seq, n_classes)
    assert out_bf.dtype == jnp.float32
    assert jnp.allclose(out_bf, ref, atol=1e-1, rtol=1e-1)

    # Case 2: ragged shapes (M not a multiple of 8, N not a multiple of 128)
    # to exercise row padding and the -inf class masking.
    b2_, s2_, n2_ = 3, 5, 10
    x_b = jax.random.normal(k_x2, (b2_, s2_, dim_model), jnp.float32)
    w_t2, bias2 = init_generator_params(k_p2, dim_model, n2_)
    ref2 = jax.nn.log_softmax(x_b @ w_t2 + bias2, axis=-1)
    params2 = prepare_generator_params(w_t2, bias2, operand_dtype=jnp.float32)
    out2 = jax.block_until_ready(generator_forward(x_b, params2))
    assert out2.shape == (b2_, s2_, n2_)
    assert jnp.allclose(out2, ref2, atol=1e-5, rtol=1e-5)

    print("KERNEL_OK")
</pallas_src>

<mosaic_0001>
module attributes {stable_mosaic.version = 11 : i64} {
  func.func @_logits_lse_kernel(%arg0: i32, %arg1: i32, %arg2: memref<16x32xf32, #tpu.memory_space<vmem>>, %arg3: memref<32x128xf32, #tpu.memory_space<vmem>>, %arg4: memref<1x128xf32, #tpu.memory_space<vmem>>, %arg5: memref<16x128xf32, #tpu.memory_space<vmem>>, %arg6: memref<16x1xf32, #tpu.memory_space<vmem>>, %arg7: memref<16x1xf32, #tpu.memory_space<vmem>>, %arg8: memref<16x1xf32, #tpu.memory_space<vmem>>) attributes {dimension_semantics = [#tpu.dimension_semantics<parallel>, #tpu.dimension_semantics<arbitrary>], iteration_bounds = array<i64: 1, 1>, scalar_prefetch = 0 : i64, scratch_operands = 2 : i64, tpu.core_type = #tpu.core_type<tc>, window_params = [{transform_indices = @transform_0, window_bounds = array<i64: 16, 32>}, {transform_indices = @transform_1, window_bounds = array<i64: 32, 128>}, {transform_indices = @transform_2, window_bounds = array<i64: 1, 128>}, {transform_indices = @transform_3, window_bounds = array<i64: 16, 128>}, {transform_indices = @transform_4, window_bounds = array<i64: 16, 1>}]} {
    %c0_i32 = arith.constant 0 : i32
    %0 = arith.cmpi eq, %arg1, %c0_i32 : i32
    %1 = arith.extui %0 : i1 to i32
    %c0_i32_0 = arith.constant 0 : i32
    %2 = arith.cmpi ne, %1, %c0_i32_0 : i32
    scf.if %2 {
      %cst_20 = arith.constant -1.000000e+30 : f32
      %29 = vector.broadcast %cst_20 : f32 to vector<16x1xf32>
      %c0_21 = arith.constant 0 : index
      %c0_22 = arith.constant 0 : index
      %30 = vector.load %arg7[%c0_21, %c0_22] : memref<16x1xf32, #tpu.memory_space<vmem>>, vector<16x1xf32>
      tpu.vector_store %arg7[%c0_21, %c0_22], %29 {strides = array<i32>} : memref<16x1xf32, #tpu.memory_space<vmem>>, vector<16x1xf32>,
      %cst_23 = arith.constant 0.000000e+00 : f32
      %31 = vector.broadcast %cst_23 : f32 to vector<16x1xf32>
      %c0_24 = arith.constant 0 : index
      %c0_25 = arith.constant 0 : index
      %32 = vector.load %arg8[%c0_24, %c0_25] : memref<16x1xf32, #tpu.memory_space<vmem>>, vector<16x1xf32>
      tpu.vector_store %arg8[%c0_24, %c0_25], %31 {strides = array<i32>} : memref<16x1xf32, #tpu.memory_space<vmem>>, vector<16x1xf32>,
    } else {
    }
    %c0 = arith.constant 0 : index
    %c0_1 = arith.constant 0 : index
    %3 = vector.load %arg2[%c0, %c0_1] : memref<16x32xf32, #tpu.memory_space<vmem>>, vector<16x32xf32>
    %c0_2 = arith.constant 0 : index
    %c0_3 = arith.constant 0 : index
    %4 = vector.load %arg3[%c0_2, %c0_3] : memref<32x128xf32, #tpu.memory_space<vmem>>, vector<32x128xf32>
    %cst = arith.constant dense<0.000000e+00> : vector<16x128xf32>
    %5 = tpu.matmul %3, %4, %cst {dimension_numbers = #tpu.dot_dimension_numbers<[1], [0], [0], [1], [0, 0, 1, 1], [], []>} : vector<16x32xf32>, vector<32x128xf32>, vector<16x128xf32> -> vector<16x128xf32>
    %c0_4 = arith.constant 0 : index
    %c0_5 = arith.constant 0 : index
    %6 = vector.load %arg4[%c0_4, %c0_5] : memref<1x128xf32, #tpu.memory_space<vmem>>, vector<1x128xf32>
    %7 = vector.broadcast %6 : vector<1x128xf32> to vector<16x128xf32>
    %8 = arith.addf %5, %7 : vector<16x128xf32>
    %c0_6 = arith.constant 0 : index
    %c0_7 = arith.constant 0 : index
    %9 = vector.load %arg5[%c0_6, %c0_7] : memref<16x128xf32, #tpu.memory_space<vmem>>, vector<16x128xf32>
    tpu.vector_store %arg5[%c0_6, %c0_7], %8 {strides = array<i32>} : memref<16x128xf32, #tpu.memory_space<vmem>>, vector<16x128xf32>,
    %c0_8 = arith.constant 0 : index
    %c0_9 = arith.constant 0 : index
    %10 = vector.load %arg7[%c0_8, %c0_9] : memref<16x1xf32, #tpu.memory_space<vmem>>, vector<16x1xf32>
    %cst_10 = arith.constant dense<0xFF800000> : vector<16xf32>
    %11 = vector.multi_reduction <maximumf>, %8, %cst_10 [1] : vector<16x128xf32> to vector<16xf32>
    %12 = vector.shape_cast %11 : vector<16xf32> to vector<16x1xf32>
    %13 = arith.maximumf %10, %12 : vector<16x1xf32>
    %c0_11 = arith.constant 0 : index
    %c0_12 = arith.constant 0 : index
    %14 = vector.load %arg8[%c0_11, %c0_12] : memref<16x1xf32, #tpu.memory_space<vmem>>, vector<16x1xf32>
    %15 = arith.subf %10, %13 : vector<16x1xf32>
    %16 = math.exp %15 : vector<16x1xf32>
    %17 = arith.mulf %14, %16 : vector<16x1xf32>
    %18 = vector.broadcast %13 : vector<16x1xf32> to vector<16x128xf32>
    %19 = arith.subf %8, %18 : vector<16x128xf32>
    %20 = math.exp %19 : vector<16x128xf32>
    %cst_13 = arith.constant dense<0.000000e+00> : vector<16xf32>
    %21 = vector.multi_reduction <add>, %20, %cst_13 [1] : vector<16x128xf32> to vector<16xf32>
    %22 = vector.shape_cast %21 : vector<16xf32> to vector<16x1xf32>
    %23 = arith.addf %17, %22 : vector<16x1xf32>
    %c0_14 = arith.constant 0 : index
    %c0_15 = arith.constant 0 : index
    %24 = vector.load %arg8[%c0_14, %c0_15] : memref<16x1xf32, #tpu.memory_space<vmem>>, vector<16x1xf32>
    tpu.vector_store %arg8[%c0_14, %c0_15], %23 {strides = array<i32>} : memref<16x1xf32, #tpu.memory_space<vmem>>, vector<16x1xf32>,
    %c0_16 = arith.constant 0 : index
    %c0_17 = arith.constant 0 : index
    %25 = vector.load %arg7[%c0_16, %c0_17] : memref<16x1xf32, #tpu.memory_space<vmem>>, vector<16x1xf32>
    tpu.vector_store %arg7[%c0_16, %c0_17], %13 {strides = array<i32>} : memref<16x1xf32, #tpu.memory_space<vmem>>, vector<16x1xf32>,
    %c0_i32_18 = arith.constant 0 : i32
    %26 = arith.cmpi eq, %arg1, %c0_i32_18 : i32
    %27 = arith.extui %26 : i1 to i32
    %c0_i32_19 = arith.constant 0 : i32
    %28 = arith.cmpi ne, %27, %c0_i32_19 : i32
    scf.if %28 {
      %c0_20 = arith.constant 0 : index
      %c0_21 = arith.constant 0 : index
      %29 = vector.load %arg7[%c0_20, %c0_21] : memref<16x1xf32, #tpu.memory_space<vmem>>, vector<16x1xf32>
      %c0_22 = arith.constant 0 : index
      %c0_23 = arith.constant 0 : index
      %30 = vector.load %arg8[%c0_22, %c0_23] : memref<16x1xf32, #tpu.memory_space<vmem>>, vector<16x1xf32>
      %31 = math.log %30 : vector<16x1xf32>
      %32 = arith.addf %29, %31 : vector<16x1xf32>
      %c0_24 = arith.constant 0 : index
      %c0_25 = arith.constant 0 : index
      %33 = vector.load %arg6[%c0_24, %c0_25] : memref<16x1xf32, #tpu.memory_space<vmem>>, vector<16x1xf32>
      tpu.vector_store %arg6[%c0_24, %c0_25], %32 {strides = array<i32>} : memref<16x1xf32, #tpu.memory_space<vmem>>, vector<16x1xf32>,
    } else {
    }
    return
  }
  func.func @transform_0(%arg0: i32, %arg1: i32) -> (i32, i32) {
    %c0_i32 = arith.constant 0 : i32
    %c0_i32_0 = arith.constant 0 : i32
    return %arg0, %c0_i32 : i32, i32
  }
  func.func @transform_1(%arg0: i32, %arg1: i32) -> (i32, i32) {
    %c0_i32 = arith.constant 0 : i32
    %c0_i32_0 = arith.constant 0 : i32
    return %c0_i32, %arg1 : i32, i32
  }
  func.func @transform_2(%arg0: i32, %arg1: i32) -> (i32, i32) {
    %c0_i32 = arith.constant 0 : i32
    %c0_i32_0 = arith.constant 0 : i32
    return %c0_i32, %arg1 : i32, i32
  }
  func.func @transform_3(%arg0: i32, %arg1: i32) -> (i32, i32) {
    %c0_i32 = arith.constant 0 : i32
    return %arg0, %arg1 : i32, i32
  }
  func.func @transform_4(%arg0: i32, %arg1: i32) -> (i32, i32) {
    %c0_i32 = arith.constant 0 : i32
    %c0_i32_0 = arith.constant 0 : i32
    return %arg0, %c0_i32 : i32, i32
  }
}

</mosaic_0001>

<llo_original>
// kernel: tpu_custom_call.1
$region0: #{tpu_custom_call.1}
  #allocation0 [shape = 'u32[]', space=smem, size = 0x4, offset = 0x4, fixed_abs, tag = 'smem constant byte address 0x4 - core index']
  #allocation1 [shape = 'u32[144,128]{1,0:T(1,128)}', space=vmem, size = 0x12000, scoped, tag = 'internal scratch']
  #allocation2 [shape = 'f32[16,1]{1,0:T(8,128)}', space=vmem, size = 0x2000, scoped, tag = 'scratch operand']
  #allocation3 [shape = 'f32[16,1]{1,0:T(8,128)}', space=vmem, size = 0x2000, scoped, tag = 'scratch operand']
  %s0 = inlined_call_operand.hbm [shape: f32[16,32], index: 0, kind: input, shape index: {}]
  %s1 = inlined_call_operand.hbm [shape: f32[32,128], index: 1, kind: input, shape index: {}]
  %s2 = inlined_call_operand.vmem [shape: f32[1,128], index: 2, kind: input, shape index: {}]
  %s3 = inlined_call_operand.hbm [shape: f32[16,128], index: 3, kind: output, shape index: {0}]
  %s4 = inlined_call_operand.vmem [shape: f32[16,1], index: 4, kind: output, shape index: {1}]
  %5 = xla_tuple %s3, %s4
  %s6 = sld [smem:[#allocation0]]
  $region46: #{tpu_custom_call.1} parent=0
    _
  %s8 = ssub.s32 1, %s6
  %s9 = scalar_select 0, %s8, %s6
  $region1: #{tpu_custom_call.1} parent=0
    #allocation4 [shape = 'u8[8192]{0}', space=vmem, size = 0x2000, scoped, tag = 'input window, operand 0, single buffered']
    #allocation5 [shape = 's32[1]{0}', space=sflag, size = 0x4, scoped, tag = 'scoped memory for tpu_custom_call.1']
    #allocation6 [shape = 's32[1]{0}', space=sflag, size = 0x4, scoped, tag = 'scoped memory for tpu_custom_call.1']
    #allocation7 [shape = 'u8[16384]{0}', space=vmem, size = 0x4000, scoped, tag = 'input window, operand 1, single buffered']
    #allocation8 [shape = 's32[1]{0}', space=sflag, size = 0x4, scoped, tag = 'scoped memory for tpu_custom_call.1']
    #allocation9 [shape = 'u8[8192]{0}', space=vmem, size = 0x2000, scoped, tag = 'output window, operand 0, single buffered']
    %10 = vsyncpa [#allocation5], 0
    %11 = vsyncpa [#allocation8], 0
    %12 = vsyncpa [#allocation6], 0
    // Predicated region
    $region2: #{tpu_custom_call.1} parent=1 // pred_check
      _
    $region3: #{tpu_custom_call.1} parent=1 // pred_check_branch
      %14 = sbr.rel (0) target = $region5
    $region4: #{tpu_custom_call.1} parent=1 // pred_region
      %s16 = ssub.s32 256, 256
      %17 = vsyncadd [#allocation5], %s16
      %s18 = sshll.u32 [#allocation4], 4
      %s19 = int_to_ptr.vmem [resolvable:$true] %s18
      %24 = dma.hbm_to_vmem [thread:$0]  %s0, 256, %s19, [#allocation5], 128, 128, 8
    $region5: #{tpu_custom_call.1} parent=1 // pred_fallthru
      _
    // Predicated region
    $region6: #{tpu_custom_call.1} parent=1 // pred_check
      _
    $region7: #{tpu_custom_call.1} parent=1 // pred_check_branch
      %26 = sbr.rel (0) target = $region9
    $region8: #{tpu_custom_call.1} parent=1 // pred_region
      %s28 = ssub.s32 512, 512
      %29 = vsyncadd [#allocation8], %s28
      %s30 = sshll.u32 [#allocation7], 4
      %s31 = int_to_ptr.vmem [resolvable:$true] %s30
      %36 = dma.hbm_to_vmem [thread:$0]  %s1, 512, %s31, [#allocation8], 128, 128, 8
    $region9: #{tpu_custom_call.1} parent=1 // pred_fallthru
      _
    // Predicated region
    $region10: #{tpu_custom_call.1} parent=1 // pred_check
      _
    $region11: #{tpu_custom_call.1} parent=1 // pred_check_branch
      %38 = sbr.rel (0) target = $region13
    $region12: #{tpu_custom_call.1} parent=1 // pred_region
      _
    $region13: #{tpu_custom_call.1} parent=1 // pred_fallthru
      _
    // Predicated region
    $region14: #{tpu_custom_call.1} parent=1 // pred_check
      _
    $region15: #{tpu_custom_call.1} parent=1 // pred_check_branch
      %40 = sbr.rel (0) target = $region17
    $region16: #{tpu_custom_call.1} parent=1 // pred_region
      %41 = dma.done [#allocation5], 256
    $region17: #{tpu_custom_call.1} parent=1 // pred_fallthru
      _
    // Predicated region
    $region18: #{tpu_custom_call.1} parent=1 // pred_check
      _
    $region19: #{tpu_custom_call.1} parent=1 // pred_check_branch
      %43 = sbr.rel (0) target = $region21
    $region20: #{tpu_custom_call.1} parent=1 // pred_region
      %44 = dma.done [#allocation8], 512
    $region21: #{tpu_custom_call.1} parent=1 // pred_fallthru
      _
    %p45 = scmp.eq.s32.totalorder 0, 0
    // Predicated region
    $region22: #{tpu_custom_call.1} parent=1 // pred_check
      %p46 = pneg %p45
    $region23: #{tpu_custom_call.1} parent=1 // pred_check_branch
      %48 = sbr.rel (%p46) target = $region25
    $region24: #{tpu_custom_call.1} parent=1 // pred_region
      %vm49 = vcmask 7168
      %50 = vst.msk [vmem:[#allocation2] sm:$0xff] %vm49, -1e+30
      %51 = vst.msk [vmem:[#allocation2 + $0x8] sm:$0xff] %vm49, -1e+30
      %52 = vst.msk [vmem:[#allocation3] sm:$0xff] %vm49, 0.0
      %53 = vst.msk [vmem:[#allocation3 + $0x8] sm:$0xff] %vm49, 0.0
    $region25: #{tpu_custom_call.1} parent=1 // pred_fallthru
      _
    %v54 = vld [vmem:[#allocation4] sm:$0xff]
    %v55 = vld [vmem:[#allocation4 + $0x8] sm:$0xff]
    %v56 = vld [vmem:[#allocation7] sm:$0xff]
    %v57 = vld [vmem:[#allocation7 + $0x8] sm:$0xff]
    %v58 = vld [vmem:[#allocation7 + $0x10] sm:$0xff]
    %v59 = vld [vmem:[#allocation7 + $0x18] sm:$0xff]
    %v60 = vld [vmem:[%s2] sm:$0x1]
    %v62 = vlaneseq
    %v63 = vshrl.u32 %v62, 7
    %v64 = vsub.s32 0, %v63
    %v65 = vrot.slane %v60, %v64
    %vm67 = vcmask 261120
    %v69 = vsel %vm67, %v54, 0
    %v72 = vsel %vm67, %v55, 0
    %74 = vmatprep.subr.mxu0 0.0
    %75 = vmatpush1.msra.mxu0 0.0
    %76 = vmatprep.subr.mxu0 0.0
    %77 = vmatpush1.msra.mxu0 0.0
    %78 = vmatprep.subr.mxu0 0.0
    %79 = vmatpush1.msra.mxu0 0.0
    %80 = vmatprep.subr.mxu0 0.0
    %81 = vmatpush1.msra.mxu0 0.0
    %82 = vmatprep.subr.mxu0 0.0
    %83 = vmatpush1.msra.mxu0 0.0
    %84 = vmatprep.subr.mxu0 0.0
    %85 = vmatpush1.msra.mxu0 0.0
    %86 = vmatprep.subr.mxu0 0.0
    %87 = vmatpush1.msra.mxu0 0.0
    %88 = vmatprep.subr.mxu0 0.0
    %89 = vmatpush1.msra.mxu0 0.0
    %90 = vmatprep.subr.mxu0 0.0
    %91 = vmatpush1.msra.mxu0 0.0
    %92 = vmatprep.subr.mxu0 0.0
    %93 = vmatpush1.msra.mxu0 0.0
    %94 = vmatprep.subr.mxu0 0.0
    %95 = vmatpush1.msra.mxu0 0.0
    %96 = vmatprep.subr.mxu0 0.0
    %97 = vmatpush1.msra.mxu0 0.0
    %98 = vmatprep.subr.mxu0 0.0
    %99 = vmatpush1.msra.mxu0 %v59
    %100 = vmatprep.subr.mxu0 0.0
    %101 = vmatpush1.msra.mxu0 %v58
    %102 = vmatprep.subr.mxu0 0.0
    %103 = vmatpush1.msra.mxu0 %v57
    %104 = vmatprep.subr.mxu0 0.0
    %105 = vmatpush1.msra.mxu0 %v56
    %106 = vmatprep.subr.mxu0 0.0
    %107 = vmatpush2.msra.mxu0 0.0
    %108 = vmatprep.subr.mxu0 0.0
    %109 = vmatpush2.msra.mxu0 0.0
    %110 = vmatprep.subr.mxu0 0.0
    %111 = vmatpush2.msra.mxu0 0.0
    %112 = vmatprep.subr.mxu0 0.0
    %113 = vmatpush2.msra.mxu0 0.0
    %114 = vmatprep.subr.mxu0 0.0
    %115 = vmatpush2.msra.mxu0 0.0
    %116 = vmatprep.subr.mxu0 0.0
    %117 = vmatpush2.msra.mxu0 0.0
    %118 = vmatprep.subr.mxu0 0.0
    %119 = vmatpush2.msra.mxu0 0.0
    %120 = vmatprep.subr.mxu0 0.0
    %121 = vmatpush2.msra.mxu0 0.0
    %122 = vmatprep.subr.mxu0 0.0
    %123 = vmatpush2.msra.mxu0 0.0
    %124 = vmatprep.subr.mxu0 0.0
    %125 = vmatpush2.msra.mxu0 0.0
    %126 = vmatprep.subr.mxu0 0.0
    %127 = vmatpush2.msra.mxu0 0.0
    %128 = vmatprep.subr.mxu0 0.0
    %129 = vmatpush2.msra.mxu0 0.0
    %130 = vmatprep.subr.mxu0 0.0
    %131 = vmatpush2.msra.mxu0 0.0
    %132 = vmatprep.subr.mxu0 0.0
    %133 = vmatpush2.msra.mxu0 0.0
    %134 = vmatprep.subr.mxu0 0.0
    %135 = vmatpush2.msra.mxu0 0.0
    %136 = vmatprep.subr.mxu0 0.0
    %137 = vmatpush2.msra.mxu0 0.0
    %138 = vmatprep.mubr.f32.mxu0 0.0
    %139 = vmatmul.mubr.f32.gmra.mxu0 %v69
    %v140 = vpop.f32.mrf.mxu0
    %v141 = vadd.f32 %v65, %v140
    %v142 = vpop.f32.mrf.mxu0
    %143 = vmatprep.mubr.f32.mxu0 0.0
    %144 = vmatmul.mubr.f32.gmra.mxu0 %v72
    %v145 = vpop.f32.mrf.mxu0
    %v146 = vadd.f32 %v65, %v145
    %v147 = vpop.f32.mrf.mxu0
    %148 = vdwg.mxu0
    %149 = vst [vmem:[#allocation9] sm:$0xff] %v141
    %150 = vst [vmem:[#allocation9 + $0x8] sm:$0xff] %v146
    %v151 = vld [vmem:[#allocation2] sm:$0xff]
    %v152 = vld [vmem:[#allocation2 + $0x8] sm:$0xff]
    %153 = vmax.xlane.f32.xlu0 %v141
    %v154 = vpop.xlane.xlu0 %153
    %155 = vmax.xlane.f32.xlu0 %v146
    %v156 = vpop.xlane.xlu0 %155
    %v157 = vmax.f32 %v151, %v154
    %v158 = vmax.f32 %v152, %v156
    %v159 = vld [vmem:[#allocation3] sm:$0xff]
    %v160 = vld [vmem:[#allocation3 + $0x8] sm:$0xff]
    %v161 = vsub.f32 %v151, %v157
    %v162 = vsub.f32 %v152, %v158
    %v163 = vmul.f32 %v161, 1.442695
    %v164 = vpow.pop %v163
    %v165 = vmul.f32 %v162, 1.442695
    %v166 = vpow.pop %v165
    %v167 = vmul.f32 %v159, %v164
    %v168 = vmul.f32 %v160, %v166
    %170 = vset.pattern.permute.xlu0 0
    %171 = vperm.xlu0 %170, %v157
    %v172 = vpop.permute.xlu0 %171
    %175 = vset.pattern.permute.xlu0 0
    %176 = vperm.xlu0 %175, %v158
    %v177 = vpop.permute.xlu0 %176
    %v179 = vsub.f32 %v141, %v172
    %v180 = vsub.f32 %v146, %v177
    %v181 = vmul.f32 %v179, 1.442695
    %v182 = vpow.pop %v181
    %v183 = vmul.f32 %v180, 1.442695
    %v184 = vpow.pop %v183
    %185 = vadd.xlane.f32.xlu0 %v182
    %v186 = vpop.xlane.xlu0 %185
    %187 = vadd.xlane.f32.xlu0 %v184
    %v188 = vpop.xlane.xlu0 %187
    %v189 = vadd.f32 %v167, %v186
    %v190 = vadd.f32 %v168, %v188
    %vm191 = vcmask 7168
    %192 = vst.msk [vmem:[#allocation3] sm:$0xff] %vm191, %v189
    %193 = vst.msk [vmem:[#allocation3 + $0x8] sm:$0xff] %vm191, %v190
    %194 = vst.msk [vmem:[#allocation2] sm:$0xff] %vm191, %v157
    %195 = vst.msk [vmem:[#allocation2 + $0x8] sm:$0xff] %vm191, %v158
    // Predicated region
    $region26: #{tpu_custom_call.1} parent=1 // pred_check
      %p196 = pneg %p45
    $region27: #{tpu_custom_call.1} parent=1 // pred_check_branch
      %198 = sbr.rel (%p196) target = $region29
    $region28: #{tpu_custom_call.1} parent=1 // pred_region
      %v199 = vld [vmem:[#allocation2] sm:$0xff]
      %v200 = vld [vmem:[#allocation2 + $0x8] sm:$0xff]
      %v201 = vld [vmem:[#allocation3] sm:$0xff]
      %v202 = vld [vmem:[#allocation3 + $0x8] sm:$0xff]
      %v203 = vlog2.pop %v201
      %v204 = vmul.f32 %v203, 0.6931472
      %v205 = vlog2.pop %v202
      %v206 = vmul.f32 %v205, 0.6931472
      %v207 = vadd.f32 %v199, %v204
      %v208 = vadd.f32 %v200, %v206
      %209 = vst.msk [vmem:[%s4] sm:$0xff] %vm191, %v207
      %210 = vst.msk [vmem:[%s4 + $0x8] sm:$0xff] %vm191, %v208
    $region29: #{tpu_custom_call.1} parent=1 // pred_fallthru
      _
    // Predicated region
    $region30: #{tpu_custom_call.1} parent=1 // pred_check
      _
    $region31: #{tpu_custom_call.1} parent=1 // pred_check_branch
      %212 = sbr.rel (0) target = $region33
    $region32: #{tpu_custom_call.1} parent=1 // pred_region
      %s214 = ssub.s32 256, 256
      %215 = vsyncadd [#allocation6], %s214
      %s216 = sshll.u32 [#allocation9], 4
      %s217 = int_to_ptr.vmem [resolvable:$true] %s216
      %222 = dma.vmem_to_hbm [thread:$0]  %s217, 256, %s3, [#allocation6], 128, 128, 8
    $region33: #{tpu_custom_call.1} parent=1 // pred_fallthru
      _
    // Predicated region
    $region34: #{tpu_custom_call.1} parent=1 // pred_check
      _
    $region35: #{tpu_custom_call.1} parent=1 // pred_check_branch
      %224 = sbr.rel (0) target = $region37
    $region36: #{tpu_custom_call.1} parent=1 // pred_region
      _
    $region37: #{tpu_custom_call.1} parent=1 // pred_fallthru
      _
    // Predicated region
    $region38: #{tpu_custom_call.1} parent=1 // pred_check
      _
    $region39: #{tpu_custom_call.1} parent=1 // pred_check_branch
      %226 = sbr.rel (0) target = $region41
    $region40: #{tpu_custom_call.1} parent=1 // pred_region
      %227 = dma.done [#allocation6], 256
    $region41: #{tpu_custom_call.1} parent=1 // pred_fallthru
      _
    // Predicated region
    $region42: #{tpu_custom_call.1} parent=1 // pred_check
      _
    $region43: #{tpu_custom_call.1} parent=1 // pred_check_branch
      %229 = sbr.rel (0) target = $region45
    $region44: #{tpu_custom_call.1} parent=1 // pred_region
      _
    $region45: #{tpu_custom_call.1} parent=1 // pred_fallthru
      _
    %230 = vsyncpa [#allocation5], 1
    %231 = vsyncpa [#allocation8], 1
    %232 = vsyncpa [#allocation6], 1

</llo_original>
